<compile_context>
chip_gen: v7x
topology: tpu7x:2x2x1
jax: 0.10.0
libtpu: 0.0.40
codegen_flags: <defaults>
</compile_context>

<pallas_src>
import functools

import jax
import jax.numpy as jnp
from jax import lax
from jax.experimental import pallas as pl
from jax.experimental.pallas import tpu as pltpu

H1, H2 = 80, 10          # logical hidden widths (PyTorch module)
H1P, H2P = 128, 16       # padded hidden widths (lane / sublane friendly)
TILE_B = 256             # batch rows per grid step (lanes of the activation tiles)


def mlp_kernel(x_ref, w1_ref, b1_ref, w2_ref, b2_ref, w3_ref, b3_ref, o_ref):
    # x_ref: (TILE_B, d_in) f32 in its natural layout; cast to bf16 on the VPU.
    xb = x_ref[...].astype(jnp.bfloat16)

    # fc1: contract on d_in so the result is (H1P, TILE_B) -- batch stays on
    # lanes (lane-dense) with no wrapper-side transpose of x. MXU, f32 accum.
    h1 = lax.dot_general(
        w1_ref[...], xb,
        dimension_numbers=(((1,), (1,)), ((), ())),
        preferred_element_type=jnp.float32)
    h1 = jnp.maximum(h1 + b1_ref[...], 0.0)            # bias/ReLU in f32 (v5e-safe)

    # fc2: (H2P, H1P) @ (H1P, TILE_B) -> (H2P, TILE_B)
    h2 = jnp.dot(w2_ref[...], h1.astype(jnp.bfloat16),
                 preferred_element_type=jnp.float32)
    h2 = jnp.maximum(h2 + b2_ref[...], 0.0)

    # fc3 (output width 1): VPU multiply + cross-sublane reduce (XLU), MXU-free.
    out = jnp.sum(h2 * w3_ref[...], axis=0, keepdims=True) + b3_ref[...]
    o_ref[...] = out.astype(o_ref.dtype)                # (1, TILE_B) lane-dense store


@functools.partial(jax.jit, static_argnames=("tile_b",))
def mlp_classifier_forward(x, w1, b1, w2, b2, w3, b3, *, tile_b=TILE_B):
    """x: (B, input_dim) f32. Packed params from pack_params(). Returns (B, 1) f32."""
    B, d_in = x.shape
    grid = -(-B // tile_b)               # ceil
    bp = grid * tile_b

    # Only pad the batch axis when ragged (cheap; usually a no-op).
    if bp != B:
        x = jnp.pad(x, ((0, bp - B), (0, 0)))

    flops = 2 * bp * (d_in * H1P + H1P * H2P + H2P)
    bytes_accessed = (
        bp * d_in * 4 + bp * 4                                  # streamed x + out
        + w1.size * 2 + w2.size * 2                             # resident bf16 weights
        + (b1.size + b2.size + w3.size + b3.size) * 4)          # resident f32 params

    out = pl.pallas_call(
        mlp_kernel,
        out_shape=jax.ShapeDtypeStruct((1, bp), jnp.float32),
        grid=(grid,),
        in_specs=[
            pl.BlockSpec((tile_b, d_in), lambda i: (i, 0)),     # x tile (streamed)
            pl.BlockSpec(w1.shape, lambda i: (0, 0)),           # weights: VMEM-resident
            pl.BlockSpec(b1.shape, lambda i: (0, 0)),
            pl.BlockSpec(w2.shape, lambda i: (0, 0)),
            pl.BlockSpec(b2.shape, lambda i: (0, 0)),
            pl.BlockSpec(w3.shape, lambda i: (0, 0)),
            pl.BlockSpec(b3.shape, lambda i: (0, 0)),
        ],
        out_specs=pl.BlockSpec((1, tile_b), lambda i: (0, i)),
        compiler_params=pltpu.CompilerParams(
            dimension_semantics=("parallel",),   # shards batch tiles across v7x's 2 TCs
            vmem_limit_bytes=4 * 1024 * 1024,    # real residency is well under 1 MiB
        ),
        cost_estimate=pl.CostEstimate(
            flops=flops, transcendentals=0, bytes_accessed=bytes_accessed),
    )(x, w1, b1, w2, b2, w3, b3)

    # (1, B) -> (B, 1) is a free row-major reshape after slicing off padded columns.
    return out[0, :B].reshape(B, 1)


def init_params(key, input_dim):
    """Deterministic synthetic parameters in PyTorch nn.Linear layout (out, in)."""
    k = jax.random.split(key, 6)
    w1 = jax.random.normal(k[0], (H1, input_dim), jnp.float32) * 0.1
    b1 = jax.random.normal(k[1], (H1,), jnp.float32) * 0.1
    w2 = jax.random.normal(k[2], (H2, H1), jnp.float32) * 0.1
    b2 = jax.random.normal(k[3], (H2,), jnp.float32) * 0.1
    w3 = jax.random.normal(k[4], (1, H2), jnp.float32) * 0.1
    b3 = jax.random.normal(k[5], (1,), jnp.float32) * 0.1
    return w1, b1, w2, b2, w3, b3


def pack_params(w1, b1, w2, b2, w3, b3):
    """Zero-pad hidden dims to TPU-friendly sizes; bf16 matmul weights, f32 rest.
    d_in is intentionally NOT padded (kernel is not MXU-bound)."""
    d_in = w1.shape[1]
    w1p = jnp.zeros((H1P, d_in), jnp.float32).at[:H1].set(w1).astype(jnp.bfloat16)
    b1p = jnp.zeros((H1P, 1), jnp.float32).at[:H1, 0].set(b1)
    w2p = jnp.zeros((H2P, H1P), jnp.float32).at[:H2, :H1].set(w2).astype(jnp.bfloat16)
    b2p = jnp.zeros((H2P, 1), jnp.float32).at[:H2, 0].set(b2)
    w3p = jnp.zeros((H2P, 1), jnp.float32).at[:H2, 0].set(w3[0])
    b3p = b3.reshape(1, 1)
    return w1p, b1p, w2p, b2p, w3p, b3p


def _reference(x, w1, b1, w2, b2, w3, b3):
    """Pure-JAX reference with matching bf16 operand quantization (eval dropout)."""
    xb = x.astype(jnp.bfloat16)
    w1b, w2b = w1.astype(jnp.bfloat16), w2.astype(jnp.bfloat16)
    h1 = jnp.maximum(jnp.dot(xb, w1b.T, preferred_element_type=jnp.float32) + b1, 0.0)
    h2 = jnp.maximum(
        jnp.dot(h1.astype(jnp.bfloat16), w2b.T, preferred_element_type=jnp.float32) + b2,
        0.0)
    return jnp.sum(h2 * w3.reshape(1, H2), axis=-1, keepdims=True) + b3


if __name__ == "__main__":
    input_dim = 32

    key = jax.random.PRNGKey(0)
    kx, kx2, kp = jax.random.split(key, 3)
    raw = init_params(kp, input_dim)
    params = pack_params(*raw)

    # Case 1: batch divides TILE_B -> 4 grid steps (exercises the pipelined grid).
    x = jax.random.normal(kx, (1024, input_dim), jnp.float32)
    out = jax.block_until_ready(mlp_classifier_forward(x, *params))
    ref = _reference(x, *raw)
    assert out.shape == (1024, 1)
    assert jnp.allclose(out, ref, atol=1e-2, rtol=1e-2), float(jnp.max(jnp.abs(out - ref)))

    # Case 2: ragged batch -> exercises the pad + slice path.
    x2 = jax.random.normal(kx2, (200, input_dim), jnp.float32)
    out2 = jax.block_until_ready(mlp_classifier_forward(x2, *params))
    ref2 = _reference(x2, *raw)
    assert out2.shape == (200, 1)
    assert jnp.allclose(out2, ref2, atol=1e-2, rtol=1e-2), float(jnp.max(jnp.abs(out2 - ref2)))

    # TODO(synk): training-mode dropout would need pltpu.prng_seed/prng_random_bits;
    # this kernel implements inference (eval) semantics only.
    print("KERNEL_OK")
</pallas_src>

<mosaic_0001>
module attributes {stable_mosaic.version = 11 : i64} {
  func.func @mlp_kernel(%arg0: i32, %arg1: memref<256x32xf32, #tpu.memory_space<vmem>>, %arg2: memref<128x32xbf16, #tpu.memory_space<vmem>>, %arg3: memref<128x1xf32, #tpu.memory_space<vmem>>, %arg4: memref<16x128xbf16, #tpu.memory_space<vmem>>, %arg5: memref<16x1xf32, #tpu.memory_space<vmem>>, %arg6: memref<16x1xf32, #tpu.memory_space<vmem>>, %arg7: memref<1x1xf32, #tpu.memory_space<vmem>>, %arg8: memref<1x256xf32, #tpu.memory_space<vmem>>) attributes {dimension_semantics = [#tpu.dimension_semantics<parallel>], iteration_bounds = array<i64: 4>, scalar_prefetch = 0 : i64, scratch_operands = 0 : i64, tpu.core_type = #tpu.core_type<tc>, window_params = [{transform_indices = @transform_0, window_bounds = array<i64: 256, 32>}, {pipeline_mode = #tpu.pipeline_mode<synchronous>, transform_indices = @transform_1, window_bounds = array<i64: 128, 32>}, {pipeline_mode = #tpu.pipeline_mode<synchronous>, transform_indices = @transform_2, window_bounds = array<i64: 128, 1>}, {pipeline_mode = #tpu.pipeline_mode<synchronous>, transform_indices = @transform_3, window_bounds = array<i64: 16, 128>}, {pipeline_mode = #tpu.pipeline_mode<synchronous>, transform_indices = @transform_4, window_bounds = array<i64: 16, 1>}, {pipeline_mode = #tpu.pipeline_mode<synchronous>, transform_indices = @transform_5, window_bounds = array<i64: 16, 1>}, {pipeline_mode = #tpu.pipeline_mode<synchronous>, transform_indices = @transform_6, window_bounds = array<i64: 1, 1>}, {transform_indices = @transform_7, window_bounds = array<i64: 1, 256>}]} {
    %c0 = arith.constant 0 : index
    %c0_0 = arith.constant 0 : index
    %0 = vector.load %arg1[%c0, %c0_0] : memref<256x32xf32, #tpu.memory_space<vmem>>, vector<256x32xf32>
    %1 = arith.truncf %0 : vector<256x32xf32> to vector<256x32xbf16>
    %c0_1 = arith.constant 0 : index
    %c0_2 = arith.constant 0 : index
    %2 = vector.load %arg2[%c0_1, %c0_2] : memref<128x32xbf16, #tpu.memory_space<vmem>>, vector<128x32xbf16>
    %cst = arith.constant dense<0.000000e+00> : vector<128x256xf32>
    %3 = tpu.matmul %2, %1, %cst {dimension_numbers = #tpu.dot_dimension_numbers<[1], [1], [0], [0], [0, 0, 1, 0], [], []>} : vector<128x32xbf16>, vector<256x32xbf16>, vector<128x256xf32> -> vector<128x256xf32>
    %c0_3 = arith.constant 0 : index
    %c0_4 = arith.constant 0 : index
    %4 = vector.load %arg3[%c0_3, %c0_4] : memref<128x1xf32, #tpu.memory_space<vmem>>, vector<128x1xf32>
    %5 = vector.broadcast %4 : vector<128x1xf32> to vector<128x256xf32>
    %6 = arith.addf %3, %5 : vector<128x256xf32>
    %cst_5 = arith.constant 0.000000e+00 : f32
    %7 = vector.broadcast %cst_5 : f32 to vector<128x256xf32>
    %8 = arith.maximumf %6, %7 : vector<128x256xf32>
    %c0_6 = arith.constant 0 : index
    %c0_7 = arith.constant 0 : index
    %9 = vector.load %arg4[%c0_6, %c0_7] : memref<16x128xbf16, #tpu.memory_space<vmem>>, vector<16x128xbf16>
    %10 = arith.truncf %8 : vector<128x256xf32> to vector<128x256xbf16>
    %cst_8 = arith.constant dense<0.000000e+00> : vector<16x256xf32>
    %11 = tpu.matmul %9, %10, %cst_8 {dimension_numbers = #tpu.dot_dimension_numbers<[1], [0], [0], [1], [0, 0, 1, 1], [], []>} : vector<16x128xbf16>, vector<128x256xbf16>, vector<16x256xf32> -> vector<16x256xf32>
    %c0_9 = arith.constant 0 : index
    %c0_10 = arith.constant 0 : index
    %12 = vector.load %arg5[%c0_9, %c0_10] : memref<16x1xf32, #tpu.memory_space<vmem>>, vector<16x1xf32>
    %13 = vector.broadcast %12 : vector<16x1xf32> to vector<16x256xf32>
    %14 = arith.addf %11, %13 : vector<16x256xf32>
    %cst_11 = arith.constant 0.000000e+00 : f32
    %15 = vector.broadcast %cst_11 : f32 to vector<16x256xf32>
    %16 = arith.maximumf %14, %15 : vector<16x256xf32>
    %c0_12 = arith.constant 0 : index
    %c0_13 = arith.constant 0 : index
    %17 = vector.load %arg6[%c0_12, %c0_13] : memref<16x1xf32, #tpu.memory_space<vmem>>, vector<16x1xf32>
    %18 = vector.broadcast %17 : vector<16x1xf32> to vector<16x256xf32>
    %19 = arith.mulf %16, %18 : vector<16x256xf32>
    %cst_14 = arith.constant dense<0.000000e+00> : vector<256xf32>
    %20 = vector.multi_reduction <add>, %19, %cst_14 [0] : vector<16x256xf32> to vector<256xf32>
    %21 = vector.shape_cast %20 : vector<256xf32> to vector<1x256xf32>
    %c0_15 = arith.constant 0 : index
    %c0_16 = arith.constant 0 : index
    %22 = vector.load %arg7[%c0_15, %c0_16] : memref<1x1xf32, #tpu.memory_space<vmem>>, vector<1x1xf32>
    %23 = vector.broadcast %22 : vector<1x1xf32> to vector<1x256xf32>
    %24 = arith.addf %21, %23 : vector<1x256xf32>
    %c0_17 = arith.constant 0 : index
    %c0_18 = arith.constant 0 : index
    %25 = vector.load %arg8[%c0_17, %c0_18] : memref<1x256xf32, #tpu.memory_space<vmem>>, vector<1x256xf32>
    tpu.vector_store %arg8[%c0_17, %c0_18], %24 {strides = array<i32>} : memref<1x256xf32, #tpu.memory_space<vmem>>, vector<1x256xf32>,
    return
  }
  func.func @transform_0(%arg0: i32) -> (i32, i32) {
    %c0_i32 = arith.constant 0 : i32
    %c0_i32_0 = arith.constant 0 : i32
    return %arg0, %c0_i32 : i32, i32
  }
  func.func @transform_1(%arg0: i32) -> (i32, i32) {
    %c0_i32 = arith.constant 0 : i32
    %c0_i32_0 = arith.constant 0 : i32
    %c0_i32_1 = arith.constant 0 : i32
    return %c0_i32, %c0_i32_0 : i32, i32
  }
  func.func @transform_2(%arg0: i32) -> (i32, i32) {
    %c0_i32 = arith.constant 0 : i32
    %c0_i32_0 = arith.constant 0 : i32
    %c0_i32_1 = arith.constant 0 : i32
    return %c0_i32, %c0_i32_0 : i32, i32
  }
  func.func @transform_3(%arg0: i32) -> (i32, i32) {
    %c0_i32 = arith.constant 0 : i32
    %c0_i32_0 = arith.constant 0 : i32
    %c0_i32_1 = arith.constant 0 : i32
    return %c0_i32, %c0_i32_0 : i32, i32
  }
  func.func @transform_4(%arg0: i32) -> (i32, i32) {
    %c0_i32 = arith.constant 0 : i32
    %c0_i32_0 = arith.constant 0 : i32
    %c0_i32_1 = arith.constant 0 : i32
    return %c0_i32, %c0_i32_0 : i32, i32
  }
  func.func @transform_5(%arg0: i32) -> (i32, i32) {
    %c0_i32 = arith.constant 0 : i32
    %c0_i32_0 = arith.constant 0 : i32
    %c0_i32_1 = arith.constant 0 : i32
    return %c0_i32, %c0_i32_0 : i32, i32
  }
  func.func @transform_6(%arg0: i32) -> (i32, i32) {
    %c0_i32 = arith.constant 0 : i32
    %c0_i32_0 = arith.constant 0 : i32
    %c0_i32_1 = arith.constant 0 : i32
    return %c0_i32, %c0_i32_0 : i32, i32
  }
  func.func @transform_7(%arg0: i32) -> (i32, i32) {
    %c0_i32 = arith.constant 0 : i32
    %c0_i32_0 = arith.constant 0 : i32
    return %c0_i32, %arg0 : i32, i32
  }
}

</mosaic_0001>

<llo_original>
// kernel: mlp_classifier_forward.1
$region0: #{mlp_classifier_forward.1}
  #allocation0 [shape = 'u32[]', space=smem, size = 0x4, offset = 0x4, fixed_abs, tag = 'smem constant byte address 0x4 - core index']
  #allocation1 [shape = 'u32[144,128]{1,0:T(1,128)}', space=vmem, size = 0x12000, scoped, tag = 'internal scratch']
  #allocation2 [shape = 'f32[1,1]{1,0:T(1,128)S(1)}', space=vmem, size = 0x200, scoped, tag = 'scoped memory for mlp_classifier_forward.1']
  %s0 = inlined_call_operand.vmem [shape: f32[1024,32], index: 0, kind: input, shape index: {}]
  %s1 = inlined_call_operand.vmem [shape: bf16[128,32], index: 1, kind: input, shape index: {}]
  %s2 = inlined_call_operand.vmem [shape: f32[128,1], index: 2, kind: input, shape index: {}]
  %s3 = inlined_call_operand.vmem [shape: bf16[16,128], index: 3, kind: input, shape index: {}]
  %s4 = inlined_call_operand.vmem [shape: f32[16,1], index: 4, kind: input, shape index: {}]
  %s5 = inlined_call_operand.vmem [shape: f32[16,1], index: 5, kind: input, shape index: {}]
  %s6 = inlined_call_operand.<no memory space> [shape: f32[1,1], index: 6, kind: input, shape index: {}]
  %s7 = inlined_call_operand.hbm [shape: f32[1,1024], index: 7, kind: output, shape index: {}]
  %s8 = sld [smem:[#allocation0]]
  $region61: #{mlp_classifier_forward.1} parent=0
    _
  %s10 = ssub.s32 1, %s8
  %s11 = scalar_select 0, %s10, %s8
  %v12 = vstv %s6
  %13 = vst [vmem:[#allocation2] sm:$0x1] %v12
  $region1: #{mlp_classifier_forward.1} parent=0
    #allocation3 [shape = 'u8[2048]{0}', space=vmem, size = 0x800, scoped, tag = 'output window, operand 0']
    #allocation4 [shape = 's32[2]{0}', space=sflag, size = 0x8, scoped, tag = 'scoped memory for mlp_classifier_forward.1']
    %14 = vsyncpa [#allocation4], 0
    %s15 = scalar_lea.sflag [#allocation4], 1
    %16 = vsyncpa %s15, 0
    loop: start=0, step=1, limit=6
    $region2: #{mlp_classifier_forward.1} parent=1 // loop_pre_header
      _
    $region3: #{mlp_classifier_forward.1} parent=1 // loop_header
      %s18 = sphi 0, %s22
      %p19 = scmp.ge.s32.totalorder %s18, 6
      %s28 = sphi 0, %s30
      %s31 = sphi 0, %s28
      %s32 = sphi 0, %s31
      %s48 = sphi 0, %s32
      %s52 = sphi 0, %s52
      %s54 = sphi 0, %s52
      %s55 = sphi 0, %s54
      %s69 = sphi 0, %s55
      %s73 = sphi 0, %s73
      %s75 = sphi 0, %s73
      %s76 = sphi 0, %s75
      %s90 = sphi 0, %s76
      %s94 = sphi 0, %s94
      %s96 = sphi 0, %s94
      %s97 = sphi 0, %s96
      %s111 = sphi 0, %s97
      %s115 = sphi 0, %s115
      %s117 = sphi 0, %s115
      %s118 = sphi 0, %s117
      %s132 = sphi 0, %s118
      %s136 = sphi 0, %s136
      %s138 = sphi 0, %s136
      %s139 = sphi 0, %s138
      %s153 = sphi 0, %s139
      %s157 = sphi 0, %s157
      %s159 = sphi 0, %s157
      %s160 = sphi 0, %s159
      %s174 = sphi 0, %s160
      %s180 = sphi 0, %s182
      %s183 = sphi 0, %s180
      %s184 = sphi 0, %s183
      %s200 = sphi 0, %s184
    $region4: #{mlp_classifier_forward.1} parent=1 // loop_header_branch
      %21 = sbr.rel (%p19) target = $region8
    $region5: #{mlp_classifier_forward.1} parent=1 // loop_body
      %s23 = ssub.s32 %s18, 1
      %s24 = ssub.s32 %s18, 2
      %s25 = sadd.s32 %s18, 1
      %s26 = ssub.s32 %s18, %s25
      %p27 = scmp.eq.s32.totalorder %s26, 0
      %s29 = sadd.s32 %s28, 1
      %s30 = scalar_select %p27, %s28, %s29
      %p33 = pneg %p27
      %p34 = scmp.eq.s32.totalorder %s18, 3
      %p35 = por %p33, %p34
      %p36 = scmp.ne.s32.totalorder %s28, %s31
      %p37 = scmp.eq.s32.totalorder %s18, 0
      %p38 = por %p36, %p37
      %p39 = scmp.ne.s32.totalorder %s28, %s31
      %p40 = scmp.eq.s32.totalorder %s23, 3
      %p41 = por %p39, %p40
      %p42 = scmp.ne.s32.totalorder %s31, %s32
      %p43 = scmp.eq.s32.totalorder %s23, 0
      %p44 = por %p42, %p43
      %p45 = scmp.ne.s32.totalorder %s31, %s32
      %p46 = scmp.eq.s32.totalorder %s24, 3
      %p47 = por %p45, %p46
      %p49 = scmp.ne.s32.totalorder %s32, %s48
      %p50 = scmp.eq.s32.totalorder %s24, 0
      %p51 = por %p49, %p50
      %s53 = sadd.s32 %s52, 1
      %p56 = scmp.eq.s32.totalorder %s18, 3
      %p57 = scmp.ne.s32.totalorder %s52, %s54
      %p58 = scmp.eq.s32.totalorder %s18, 0
      %p59 = por %p57, %p58
      %p60 = scmp.ne.s32.totalorder %s52, %s54
      %p61 = scmp.eq.s32.totalorder %s23, 3
      %p62 = por %p60, %p61
      %p63 = scmp.ne.s32.totalorder %s54, %s55
      %p64 = scmp.eq.s32.totalorder %s23, 0
      %p65 = por %p63, %p64
      %p66 = scmp.ne.s32.totalorder %s54, %s55
      %p67 = scmp.eq.s32.totalorder %s24, 3
      %p68 = por %p66, %p67
      %p70 = scmp.ne.s32.totalorder %s55, %s69
      %p71 = scmp.eq.s32.totalorder %s24, 0
      %p72 = por %p70, %p71
      %s74 = sadd.s32 %s73, 1
      %p77 = scmp.eq.s32.totalorder %s18, 3
      %p78 = scmp.ne.s32.totalorder %s73, %s75
      %p79 = scmp.eq.s32.totalorder %s18, 0
      %p80 = por %p78, %p79
      %p81 = scmp.ne.s32.totalorder %s73, %s75
      %p82 = scmp.eq.s32.totalorder %s23, 3
      %p83 = por %p81, %p82
      %p84 = scmp.ne.s32.totalorder %s75, %s76
      %p85 = scmp.eq.s32.totalorder %s23, 0
      %p86 = por %p84, %p85
      %p87 = scmp.ne.s32.totalorder %s75, %s76
      %p88 = scmp.eq.s32.totalorder %s24, 3
      %p89 = por %p87, %p88
      %p91 = scmp.ne.s32.totalorder %s76, %s90
      %p92 = scmp.eq.s32.totalorder %s24, 0
      %p93 = por %p91, %p92
      %s95 = sadd.s32 %s94, 1
      %p98 = scmp.eq.s32.totalorder %s18, 3
      %p99 = scmp.ne.s32.totalorder %s94, %s96
      %p100 = scmp.eq.s32.totalorder %s18, 0
      %p101 = por %p99, %p100
      %p102 = scmp.ne.s32.totalorder %s94, %s96
      %p103 = scmp.eq.s32.totalorder %s23, 3
      %p104 = por %p102, %p103
      %p105 = scmp.ne.s32.totalorder %s96, %s97
      %p106 = scmp.eq.s32.totalorder %s23, 0
      %p107 = por %p105, %p106
      %p108 = scmp.ne.s32.totalorder %s96, %s97
      %p109 = scmp.eq.s32.totalorder %s24, 3
      %p110 = por %p108, %p109
      %p112 = scmp.ne.s32.totalorder %s97, %s111
      %p113 = scmp.eq.s32.totalorder %s24, 0
      %p114 = por %p112, %p113
      %s116 = sadd.s32 %s115, 1
      %p119 = scmp.eq.s32.totalorder %s18, 3
      %p120 = scmp.ne.s32.totalorder %s115, %s117
      %p121 = scmp.eq.s32.totalorder %s18, 0
      %p122 = por %p120, %p121
      %p123 = scmp.ne.s32.totalorder %s115, %s117
      %p124 = scmp.eq.s32.totalorder %s23, 3
      %p125 = por %p123, %p124
      %p126 = scmp.ne.s32.totalorder %s117, %s118
      %p127 = scmp.eq.s32.totalorder %s23, 0
      %p128 = por %p126, %p127
      %p129 = scmp.ne.s32.totalorder %s117, %s118
      %p130 = scmp.eq.s32.totalorder %s24, 3
      %p131 = por %p129, %p130
      %p133 = scmp.ne.s32.totalorder %s118, %s132
      %p134 = scmp.eq.s32.totalorder %s24, 0
      %p135 = por %p133, %p134
      %s137 = sadd.s32 %s136, 1
      %p140 = scmp.eq.s32.totalorder %s18, 3
      %p141 = scmp.ne.s32.totalorder %s136, %s138
      %p142 = scmp.eq.s32.totalorder %s18, 0
      %p143 = por %p141, %p142
      %p144 = scmp.ne.s32.totalorder %s136, %s138
      %p145 = scmp.eq.s32.totalorder %s23, 3
      %p146 = por %p144, %p145
      %p147 = scmp.ne.s32.totalorder %s138, %s139
      %p148 = scmp.eq.s32.totalorder %s23, 0
      %p149 = por %p147, %p148
      %p150 = scmp.ne.s32.totalorder %s138, %s139
      %p151 = scmp.eq.s32.totalorder %s24, 3
      %p152 = por %p150, %p151
      %p154 = scmp.ne.s32.totalorder %s139, %s153
      %p155 = scmp.eq.s32.totalorder %s24, 0
      %p156 = por %p154, %p155
      %s158 = sadd.s32 %s157, 1
      %p161 = scmp.eq.s32.totalorder %s18, 3
      %p162 = scmp.ne.s32.totalorder %s157, %s159
      %p163 = scmp.eq.s32.totalorder %s18, 0
      %p164 = por %p162, %p163
      %p165 = scmp.ne.s32.totalorder %s157, %s159
      %p166 = scmp.eq.s32.totalorder %s23, 3
      %p167 = por %p165, %p166
      %p168 = scmp.ne.s32.totalorder %s159, %s160
      %p169 = scmp.eq.s32.totalorder %s23, 0
      %p170 = por %p168, %p169
      %p171 = scmp.ne.s32.totalorder %s159, %s160
      %p172 = scmp.eq.s32.totalorder %s24, 3
      %p173 = por %p171, %p172
      %p175 = scmp.ne.s32.totalorder %s160, %s174
      %p176 = scmp.eq.s32.totalorder %s24, 0
      %p177 = por %p175, %p176
      %s178 = ssub.s32 %s18, %s25
      %p179 = scmp.eq.s32.totalorder %s178, 0
      %s181 = sadd.s32 %s180, 1
      %s182 = scalar_select %p179, %s180, %s181
      %p185 = pneg %p179
      %p186 = scmp.eq.s32.totalorder %s18, 3
      %p187 = por %p185, %p186
      %p188 = scmp.ne.s32.totalorder %s180, %s183
      %p189 = scmp.eq.s32.totalorder %s18, 0
      %p190 = por %p188, %p189
      %p191 = scmp.ne.s32.totalorder %s180, %s183
      %p192 = scmp.eq.s32.totalorder %s23, 3
      %p193 = por %p191, %p192
      %p194 = scmp.ne.s32.totalorder %s183, %s184
      %p195 = scmp.eq.s32.totalorder %s23, 0
      %p196 = por %p194, %p195
      %p197 = scmp.ne.s32.totalorder %s183, %s184
      %p198 = scmp.eq.s32.totalorder %s24, 3
      %p199 = por %p197, %p198
      %p201 = scmp.ne.s32.totalorder %s184, %s200
      %p202 = scmp.eq.s32.totalorder %s24, 0
      %p203 = por %p201, %p202
      %p204 = scmp.le.s32.totalorder 1, %s18
      %p205 = scmp.lt.s32.totalorder %s18, 5
      %p206 = pnand %p204, %p205
      %p207 = pneg %p206
      // Predicated region
      $region9: #{mlp_classifier_forward.1} parent=5 // pred_check
        _
      $region10: #{mlp_classifier_forward.1} parent=5 // pred_check_branch
        %209 = sbr.rel (%p206) target = $region12
      $region11: #{mlp_classifier_forward.1} parent=5 // pred_region
        %s210 = ssub.s32 %s18, 1
        // Predicated region
        $region13: #{mlp_classifier_forward.1} parent=11 // pred_check
          %p211 = pneg %p65
        $region14: #{mlp_classifier_forward.1} parent=11 // pred_check_branch
          %213 = sbr.rel (%p211) target = $region16
        $region15: #{mlp_classifier_forward.1} parent=11 // pred_region
          _
        $region16: #{mlp_classifier_forward.1} parent=11 // pred_fallthru
          _
        // Predicated region
        $region17: #{mlp_classifier_forward.1} parent=11 // pred_check
          %p214 = pneg %p86
        $region18: #{mlp_classifier_forward.1} parent=11 // pred_check_branch
          %216 = sbr.rel (%p214) target = $region20
        $region19: #{mlp_classifier_forward.1} parent=11 // pred_region
          _
        $region20: #{mlp_classifier_forward.1} parent=11 // pred_fallthru
          _
        // Predicated region
        $region21: #{mlp_classifier_forward.1} parent=11 // pred_check
          %p217 = pneg %p107
        $region22: #{mlp_classifier_forward.1} parent=11 // pred_check_branch
          %219 = sbr.rel (%p217) target = $region24
        $region23: #{mlp_classifier_forward.1} parent=11 // pred_region
          _
        $region24: #{mlp_classifier_forward.1} parent=11 // pred_fallthru
          _
        // Predicated region
        $region25: #{mlp_classifier_forward.1} parent=11 // pred_check
          %p220 = pneg %p128
        $region26: #{mlp_classifier_forward.1} parent=11 // pred_check_branch
          %222 = sbr.rel (%p220) target = $region28
        $region27: #{mlp_classifier_forward.1} parent=11 // pred_region
          _
        $region28: #{mlp_classifier_forward.1} parent=11 // pred_fallthru
          _
        // Predicated region
        $region29: #{mlp_classifier_forward.1} parent=11 // pred_check
          %p223 = pneg %p149
        $region30: #{mlp_classifier_forward.1} parent=11 // pred_check_branch
          %225 = sbr.rel (%p223) target = $region32
        $region31: #{mlp_classifier_forward.1} parent=11 // pred_region
          _
        $region32: #{mlp_classifier_forward.1} parent=11 // pred_fallthru
          _
        // Predicated region
        $region33: #{mlp_classifier_forward.1} parent=11 // pred_check
          %p226 = pneg %p170
        $region34: #{mlp_classifier_forward.1} parent=11 // pred_check_branch
          %228 = sbr.rel (%p226) target = $region36
        $region35: #{mlp_classifier_forward.1} parent=11 // pred_region
          _
        $region36: #{mlp_classifier_forward.1} parent=11 // pred_fallthru
          _
      $region12: #{mlp_classifier_forward.1} parent=5 // pred_fallthru
        _
      %p229 = scmp.lt.s32.totalorder %s18, 4
      // Predicated region
      $region37: #{mlp_classifier_forward.1} parent=5 // pred_check
        %p230 = pneg %p229
      $region38: #{mlp_classifier_forward.1} parent=5 // pred_check_branch
        %232 = sbr.rel (%p230) target = $region40
      $region39: #{mlp_classifier_forward.1} parent=5 // pred_region
        // Predicated region
        $region41: #{mlp_classifier_forward.1} parent=39 // pred_check
          %p233 = pneg %p38
        $region42: #{mlp_classifier_forward.1} parent=39 // pred_check_branch
          %235 = sbr.rel (%p233) target = $region44
        $region43: #{mlp_classifier_forward.1} parent=39 // pred_region
          %s236 = smul.u32 32, %s18
          %p237 = scmp.lt.s32.totalorder %s236, 127
          %s238 = scalar_select %p237, %s236, 127
          %s239 = smul.addr %s238, 8
          %s240 = scalar_lea.vmem %s0, %s239
          %s241 = smul.u32 32, %s18
        $region44: #{mlp_classifier_forward.1} parent=39 // pred_fallthru
          _
      $region40: #{mlp_classifier_forward.1} parent=5 // pred_fallthru
        _
      %p242 = scmp.le.s32.totalorder 1, %s18
      %p243 = scmp.lt.s32.totalorder %s18, 5
      %p244 = pnand %p242, %p243
      %p245 = pneg %p244
      // Predicated region
      $region45: #{mlp_classifier_forward.1} parent=5 // pred_check
        _
      $region46: #{mlp_classifier_forward.1} parent=5 // pred_check_branch
        %247 = sbr.rel (%p244) target = $region48
      $region47: #{mlp_classifier_forward.1} parent=5 // pred_region
        %s248 = ssub.s32 %s18, 1
        %s249 = smul.u32 32, %s23
        %p250 = scmp.lt.s32.totalorder %s249, 127
        %s251 = scalar_select %p250, %s249, 127
        %s252 = smul.addr %s251, 8
        %s253 = scalar_lea.vmem %s0, %s252
        %p254 = pneg %p44
        %p255 = pneg %p41
        %p256 = pneg %p65
        %p257 = pneg %p62
        %p258 = pneg %p86
        %p259 = pneg %p83
        %p260 = pneg %p107
        %p261 = pneg %p104
        %p262 = pneg %p128
        %p263 = pneg %p125
        %p264 = pneg %p149
        %p265 = pneg %p146
        %p266 = pneg %p170
        %p267 = pneg %p167
        %p268 = pneg %p196
        %p269 = pneg %p193
        %s270 = sand.u32 %s183, 1
        %s271 = scalar_lea.sflag [#allocation4], %s270
        %s272 = sand.u32 %s183, 1
        %s273 = smul.addr %s272, 2
        %s274 = scalar_lea.vmem [#allocation3], %s273
        %s275 = smul.u32 32, %s23
        %p276 = scmp.lt.s32.totalorder %s275, 127
        %s277 = scalar_select %p276, %s275, 127
        %s278 = smul.addr %s277, 8
        %s279 = scalar_lea.vmem %s0, %s278
        %s280 = smul.u32 32, %s23
        %s281 = smul.u32 2, %s23
        %v283 = vld [vmem:[%s279] sm:$0xff]
        %v284 = vld [vmem:[%s279 + $0x8] sm:$0xff]
        %v285 = vld [vmem:[%s279 + $0x10] sm:$0xff]
        %v286 = vld [vmem:[%s279 + $0x18] sm:$0xff]
        %v287 = vld [vmem:[%s279 + $0x20] sm:$0xff]
        %v288 = vld [vmem:[%s279 + $0x28] sm:$0xff]
        %v289 = vld [vmem:[%s279 + $0x30] sm:$0xff]
        %v290 = vld [vmem:[%s279 + $0x38] sm:$0xff]
        %v291 = vld [vmem:[%s279 + $0x40] sm:$0xff]
        %v292 = vld [vmem:[%s279 + $0x48] sm:$0xff]
        %v293 = vld [vmem:[%s279 + $0x50] sm:$0xff]
        %v294 = vld [vmem:[%s279 + $0x58] sm:$0xff]
        %v295 = vld [vmem:[%s279 + $0x60] sm:$0xff]
        %v296 = vld [vmem:[%s279 + $0x68] sm:$0xff]
        %v297 = vld [vmem:[%s279 + $0x70] sm:$0xff]
        %v298 = vld [vmem:[%s279 + $0x78] sm:$0xff]
        %v299 = vld [vmem:[%s279 + $0x80] sm:$0xff]
        %v300 = vld [vmem:[%s279 + $0x88] sm:$0xff]
        %v301 = vld [vmem:[%s279 + $0x90] sm:$0xff]
        %v302 = vld [vmem:[%s279 + $0x98] sm:$0xff]
        %v303 = vld [vmem:[%s279 + $0xa0] sm:$0xff]
        %v304 = vld [vmem:[%s279 + $0xa8] sm:$0xff]
        %v305 = vld [vmem:[%s279 + $0xb0] sm:$0xff]
        %v306 = vld [vmem:[%s279 + $0xb8] sm:$0xff]
        %v307 = vld [vmem:[%s279 + $0xc0] sm:$0xff]
        %v308 = vld [vmem:[%s279 + $0xc8] sm:$0xff]
        %v309 = vld [vmem:[%s279 + $0xd0] sm:$0xff]
        %v310 = vld [vmem:[%s279 + $0xd8] sm:$0xff]
        %v311 = vld [vmem:[%s279 + $0xe0] sm:$0xff]
        %v312 = vld [vmem:[%s279 + $0xe8] sm:$0xff]
        %v313 = vld [vmem:[%s279 + $0xf0] sm:$0xff]
        %v314 = vld [vmem:[%s279 + $0xf8] sm:$0xff]
        %v315 = vpack.c.bf16 %v284, %v283
        %v316 = vpack.c.bf16 %v286, %v285
        %v317 = vpack.c.bf16 %v288, %v287
        %v318 = vpack.c.bf16 %v290, %v289
        %v319 = vpack.c.bf16 %v292, %v291
        %v320 = vpack.c.bf16 %v294, %v293
        %v321 = vpack.c.bf16 %v296, %v295
        %v322 = vpack.c.bf16 %v298, %v297
        %v323 = vpack.c.bf16 %v300, %v299
        %v324 = vpack.c.bf16 %v302, %v301
        %v325 = vpack.c.bf16 %v304, %v303
        %v326 = vpack.c.bf16 %v306, %v305
        %v327 = vpack.c.bf16 %v308, %v307
        %v328 = vpack.c.bf16 %v310, %v309
        %v329 = vpack.c.bf16 %v312, %v311
        %v330 = vpack.c.bf16 %v314, %v313
        %v331 = vld [vmem:[%s1] sm:$0xf]
        %v332 = vld [vmem:[%s1 + $0x4] sm:$0xf]
        %v333 = vld [vmem:[%s1 + $0x8] sm:$0xf]
        %v334 = vld [vmem:[%s1 + $0xc] sm:$0xf]
        %v335 = vld [vmem:[%s1 + $0x10] sm:$0xf]
        %v336 = vld [vmem:[%s1 + $0x14] sm:$0xf]
        %v337 = vld [vmem:[%s1 + $0x18] sm:$0xf]
        %v338 = vld [vmem:[%s1 + $0x1c] sm:$0xf]
        %v339 = vld [vmem:[%s1 + $0x20] sm:$0xf]
        %v340 = vld [vmem:[%s1 + $0x24] sm:$0xf]
        %v341 = vld [vmem:[%s1 + $0x28] sm:$0xf]
        %v342 = vld [vmem:[%s1 + $0x2c] sm:$0xf]
        %v343 = vld [vmem:[%s1 + $0x30] sm:$0xf]
        %v344 = vld [vmem:[%s1 + $0x34] sm:$0xf]
        %v345 = vld [vmem:[%s1 + $0x38] sm:$0xf]
        %v346 = vld [vmem:[%s1 + $0x3c] sm:$0xf]
        %v347 = vld [vmem:[%s2] sm:$0xff]
        %v348 = vld [vmem:[%s2 + $0x8] sm:$0xff]
        %v349 = vld [vmem:[%s2 + $0x10] sm:$0xff]
        %v350 = vld [vmem:[%s2 + $0x18] sm:$0xff]
        %v351 = vld [vmem:[%s2 + $0x20] sm:$0xff]
        %v352 = vld [vmem:[%s2 + $0x28] sm:$0xff]
        %v353 = vld [vmem:[%s2 + $0x30] sm:$0xff]
        %v354 = vld [vmem:[%s2 + $0x38] sm:$0xff]
        %v355 = vld [vmem:[%s2 + $0x40] sm:$0xff]
        %v356 = vld [vmem:[%s2 + $0x48] sm:$0xff]
        %v357 = vld [vmem:[%s2 + $0x50] sm:$0xff]
        %v358 = vld [vmem:[%s2 + $0x58] sm:$0xff]
        %v359 = vld [vmem:[%s2 + $0x60] sm:$0xff]
        %v360 = vld [vmem:[%s2 + $0x68] sm:$0xff]
        %v361 = vld [vmem:[%s2 + $0x70] sm:$0xff]
        %v362 = vld [vmem:[%s2 + $0x78] sm:$0xff]
        %364 = vset.pattern.permute.xlu0 0
        %365 = vperm.xlu0 %364, %v347
        %v366 = vpop.permute.xlu0 %365
        %369 = vset.pattern.permute.xlu0 0
        %370 = vperm.xlu0 %369, %v348
        %v371 = vpop.permute.xlu0 %370
        %374 = vset.pattern.permute.xlu0 0
        %375 = vperm.xlu0 %374, %v349
        %v376 = vpop.permute.xlu0 %375
        %379 = vset.pattern.permute.xlu0 0
        %380 = vperm.xlu0 %379, %v350
        %v381 = vpop.permute.xlu0 %380
        %384 = vset.pattern.permute.xlu0 0
        %385 = vperm.xlu0 %384, %v351
        %v386 = vpop.permute.xlu0 %385
        %389 = vset.pattern.permute.xlu0 0
        %390 = vperm.xlu0 %389, %v352
        %v391 = vpop.permute.xlu0 %390
        %394 = vset.pattern.permute.xlu0 0
        %395 = vperm.xlu0 %394, %v353
        %v396 = vpop.permute.xlu0 %395
        %399 = vset.pattern.permute.xlu0 0
        %400 = vperm.xlu0 %399, %v354
        %v401 = vpop.permute.xlu0 %400
        %404 = vset.pattern.permute.xlu0 0
        %405 = vperm.xlu0 %404, %v355
        %v406 = vpop.permute.xlu0 %405
        %409 = vset.pattern.permute.xlu0 0
        %410 = vperm.xlu0 %409, %v356
        %v411 = vpop.permute.xlu0 %410
        %414 = vset.pattern.permute.xlu0 0
        %415 = vperm.xlu0 %414, %v357
        %v416 = vpop.permute.xlu0 %415
        %419 = vset.pattern.permute.xlu0 0
        %420 = vperm.xlu0 %419, %v358
        %v421 = vpop.permute.xlu0 %420
        %424 = vset.pattern.permute.xlu0 0
        %425 = vperm.xlu0 %424, %v359
        %v426 = vpop.permute.xlu0 %425
        %429 = vset.pattern.permute.xlu0 0
        %430 = vperm.xlu0 %429, %v360
        %v431 = vpop.permute.xlu0 %430
        %434 = vset.pattern.permute.xlu0 0
        %435 = vperm.xlu0 %434, %v361
        %v436 = vpop.permute.xlu0 %435
        %439 = vset.pattern.permute.xlu0 0
        %440 = vperm.xlu0 %439, %v362
        %v441 = vpop.permute.xlu0 %440
        %v459 = vunpack.c.l.b16 %v331
        %v460 = vunpack.c.l.b16 %v332
        %v461 = vunpack.c.l.b16 %v333
        %v462 = vunpack.c.l.b16 %v334
        %v463 = vunpack.c.l.b16 %v335
        %v464 = vunpack.c.l.b16 %v336
        %v465 = vunpack.c.l.b16 %v337
        %v466 = vunpack.c.l.b16 %v338
        %v467 = vunpack.c.l.b16 %v339
        %v468 = vunpack.c.l.b16 %v340
        %v469 = vunpack.c.l.b16 %v341
        %v470 = vunpack.c.l.b16 %v342
        %v471 = vunpack.c.l.b16 %v343
        %v472 = vunpack.c.l.b16 %v344
        %v473 = vunpack.c.l.b16 %v345
        %v474 = vunpack.c.l.b16 %v346
        %v475 = vpack.c.b16 %v460, %v459
        %v476 = vpack.c.b16 %v462, %v461
        %v477 = vpack.c.b16 %v464, %v463
        %v478 = vpack.c.b16 %v466, %v465
        %v479 = vpack.c.b16 %v468, %v467
        %v480 = vpack.c.b16 %v470, %v469
        %v481 = vpack.c.b16 %v472, %v471
        %v482 = vpack.c.b16 %v474, %v473
        %vm483 = vcmask 261120
        %v485 = vsel %vm483, %v475, 0
        %v488 = vsel %vm483, %v476, 0
        %v491 = vsel %vm483, %v477, 0
        %v494 = vsel %vm483, %v478, 0
        %v497 = vsel %vm483, %v479, 0
        %v500 = vsel %vm483, %v480, 0
        %v503 = vsel %vm483, %v481, 0
        %v506 = vsel %vm483, %v482, 0
        %v509 = vsel %vm483, %v315, 0
        %v512 = vsel %vm483, %v316, 0
        %v515 = vsel %vm483, %v317, 0
        %v518 = vsel %vm483, %v318, 0
        %v521 = vsel %vm483, %v319, 0
        %v524 = vsel %vm483, %v320, 0
        %v527 = vsel %vm483, %v321, 0
        %v530 = vsel %vm483, %v322, 0
        %v533 = vsel %vm483, %v323, 0
        %v536 = vsel %vm483, %v324, 0
        %v539 = vsel %vm483, %v325, 0
        %v542 = vsel %vm483, %v326, 0
        %v545 = vsel %vm483, %v327, 0
        %v548 = vsel %vm483, %v328, 0
        %v551 = vsel %vm483, %v329, 0
        %v554 = vsel %vm483, %v330, 0
        %556 = vmatprep.subr.bf16.mxu0 0
        %557 = vmatpush1.bf16.xpose.msra.mxu0 %v509
        %558 = vmatprep.subr.bf16.mxu0 0
        %559 = vmatpush1.bf16.xpose.msra.mxu0 %v512
        %560 = vmatprep.subr.bf16.mxu0 0
        %561 = vmatpush1.bf16.xpose.msra.mxu0 %v515
        %562 = vmatprep.subr.bf16.mxu0 0
        %563 = vmatpush1.bf16.xpose.msra.mxu0 %v518
        %564 = vmatprep.subr.bf16.mxu0 0
        %565 = vmatpush1.bf16.xpose.msra.mxu0 %v521
        %566 = vmatprep.subr.bf16.mxu0 0
        %567 = vmatpush1.bf16.xpose.msra.mxu0 %v524
        %568 = vmatprep.subr.bf16.mxu0 0
        %569 = vmatpush1.bf16.xpose.msra.mxu0 %v527
        %570 = vmatprep.subr.bf16.mxu0 0
        %571 = vmatpush1.bf16.xpose.msra.mxu0 %v530
        %572 = vmatprep.subr.bf16.mxu0 0
        %573 = vmatpush1.bf16.xpose.msra.mxu0 %v533
        %574 = vmatprep.subr.bf16.mxu0 0
        %575 = vmatpush1.bf16.xpose.msra.mxu0 %v536
        %576 = vmatprep.subr.bf16.mxu0 0
        %577 = vmatpush1.bf16.xpose.msra.mxu0 %v539
        %578 = vmatprep.subr.bf16.mxu0 0
        %579 = vmatpush1.bf16.xpose.msra.mxu0 %v542
        %580 = vmatprep.subr.bf16.mxu0 0
        %581 = vmatpush1.bf16.xpose.msra.mxu0 %v545
        %582 = vmatprep.subr.bf16.mxu0 0
        %583 = vmatpush1.bf16.xpose.msra.mxu0 %v548
        %584 = vmatprep.subr.bf16.mxu0 0
        %585 = vmatpush1.bf16.xpose.msra.mxu0 %v551
        %586 = vmatprep.subr.bf16.mxu0 0
        %587 = vmatpush1.bf16.xpose.msra.mxu0 %v554
        %588 = vmatprep.mubr.bf16.mxu0 0
        %589 = vmatmul.mubr.bf16.gmra.mrb[0].mxu0 %v485
        %v590 = vpop.f32.mrb[0].mxu0
        %v591 = vadd.f32 %v366, %v590
        %v592 = vpop.f32.mrb[0].mxu0
        %v593 = vadd.f32 %v366, %v592
        %v594 = vpop.f32.mrb[0].mxu0
        %v595 = vadd.f32 %v371, %v594
        %v596 = vpop.f32.mrb[0].mxu0
        %v597 = vadd.f32 %v371, %v596
        %598 = vmatprep.mubr.bf16.mxu0 0
        %599 = vmatmul.mubr.bf16.gmra.mrb[0].mxu0 %v488
        %v600 = vpop.f32.mrb[0].mxu0
        %v601 = vadd.f32 %v376, %v600
        %v602 = vpop.f32.mrb[0].mxu0
        %v603 = vadd.f32 %v376, %v602
        %v604 = vpop.f32.mrb[0].mxu0
        %v605 = vadd.f32 %v381, %v604
        %v606 = vpop.f32.mrb[0].mxu0
        %v607 = vadd.f32 %v381, %v606
        %608 = vmatprep.mubr.bf16.mxu0 0
        %609 = vmatmul.mubr.bf16.gmra.mrb[0].mxu0 %v491
        %v610 = vpop.f32.mrb[0].mxu0
        %v611 = vadd.f32 %v386, %v610
        %v612 = vpop.f32.mrb[0].mxu0
        %v613 = vadd.f32 %v386, %v612
        %v614 = vpop.f32.mrb[0].mxu0
        %v615 = vadd.f32 %v391, %v614
        %v616 = vpop.f32.mrb[0].mxu0
        %v617 = vadd.f32 %v391, %v616
        %618 = vmatprep.mubr.bf16.mxu0 0
        %619 = vmatmul.mubr.bf16.gmra.mrb[0].mxu0 %v494
        %v620 = vpop.f32.mrb[0].mxu0
        %v621 = vadd.f32 %v396, %v620
        %v622 = vpop.f32.mrb[0].mxu0
        %v623 = vadd.f32 %v396, %v622
        %v624 = vpop.f32.mrb[0].mxu0
        %v625 = vadd.f32 %v401, %v624
        %v626 = vpop.f32.mrb[0].mxu0
        %v627 = vadd.f32 %v401, %v626
        %628 = vmatprep.mubr.bf16.mxu0 0
        %629 = vmatmul.mubr.bf16.gmra.mrb[0].mxu0 %v497
        %v630 = vpop.f32.mrb[0].mxu0
        %v631 = vadd.f32 %v406, %v630
        %v632 = vpop.f32.mrb[0].mxu0
        %v633 = vadd.f32 %v406, %v632
        %v634 = vpop.f32.mrb[0].mxu0
        %v635 = vadd.f32 %v411, %v634
        %v636 = vpop.f32.mrb[0].mxu0
        %v637 = vadd.f32 %v411, %v636
        %638 = vmatprep.mubr.bf16.mxu0 0
        %639 = vmatmul.mubr.bf16.gmra.mrb[0].mxu0 %v500
        %v640 = vpop.f32.mrb[0].mxu0
        %v641 = vadd.f32 %v416, %v640
        %v642 = vpop.f32.mrb[0].mxu0
        %v643 = vadd.f32 %v416, %v642
        %v644 = vpop.f32.mrb[0].mxu0
        %v645 = vadd.f32 %v421, %v644
        %v646 = vpop.f32.mrb[0].mxu0
        %v647 = vadd.f32 %v421, %v646
        %648 = vmatprep.mubr.bf16.mxu0 0
        %649 = vmatmul.mubr.bf16.gmra.mrb[0].mxu0 %v503
        %v650 = vpop.f32.mrb[0].mxu0
        %v651 = vadd.f32 %v426, %v650
        %v652 = vpop.f32.mrb[0].mxu0
        %v653 = vadd.f32 %v426, %v652
        %v654 = vpop.f32.mrb[0].mxu0
        %v655 = vadd.f32 %v431, %v654
        %v656 = vpop.f32.mrb[0].mxu0
        %v657 = vadd.f32 %v431, %v656
        %658 = vmatprep.mubr.bf16.mxu0 0
        %659 = vmatmul.mubr.bf16.gmra.mrb[0].mxu0 %v506
        %v660 = vpop.f32.mrb[0].mxu0
        %v661 = vadd.f32 %v436, %v660
        %v662 = vpop.f32.mrb[0].mxu0
        %v663 = vadd.f32 %v436, %v662
        %v664 = vpop.f32.mrb[0].mxu0
        %v665 = vadd.f32 %v441, %v664
        %v666 = vpop.f32.mrb[0].mxu0
        %v667 = vadd.f32 %v441, %v666
        %668 = vdwg.mxu0
        %v669 = vmax.f32 %v591, 0.0
        %v670 = vmax.f32 %v593, 0.0
        %v671 = vmax.f32 %v595, 0.0
        %v672 = vmax.f32 %v597, 0.0
        %v673 = vmax.f32 %v601, 0.0
        %v674 = vmax.f32 %v603, 0.0
        %v675 = vmax.f32 %v605, 0.0
        %v676 = vmax.f32 %v607, 0.0
        %v677 = vmax.f32 %v611, 0.0
        %v678 = vmax.f32 %v613, 0.0
        %v679 = vmax.f32 %v615, 0.0
        %v680 = vmax.f32 %v617, 0.0
        %v681 = vmax.f32 %v621, 0.0
        %v682 = vmax.f32 %v623, 0.0
        %v683 = vmax.f32 %v625, 0.0
        %v684 = vmax.f32 %v627, 0.0
        %v685 = vmax.f32 %v631, 0.0
        %v686 = vmax.f32 %v633, 0.0
        %v687 = vmax.f32 %v635, 0.0
        %v688 = vmax.f32 %v637, 0.0
        %v689 = vmax.f32 %v641, 0.0
        %v690 = vmax.f32 %v643, 0.0
        %v691 = vmax.f32 %v645, 0.0
        %v692 = vmax.f32 %v647, 0.0
        %v693 = vmax.f32 %v651, 0.0
        %v694 = vmax.f32 %v653, 0.0
        %v695 = vmax.f32 %v655, 0.0
        %v696 = vmax.f32 %v657, 0.0
        %v697 = vmax.f32 %v661, 0.0
        %v698 = vmax.f32 %v663, 0.0
        %v699 = vmax.f32 %v665, 0.0
        %v700 = vmax.f32 %v667, 0.0
        %v701 = vld [vmem:[%s3] sm:$0xf]
        %v702 = vld [vmem:[%s3 + $0x4] sm:$0xf]
        %v703 = vpack.c.bf16 %v671, %v669
        %v704 = vpack.c.bf16 %v672, %v670
        %v705 = vpack.c.bf16 %v675, %v673
        %v706 = vpack.c.bf16 %v676, %v674
        %v707 = vpack.c.bf16 %v679, %v677
        %v708 = vpack.c.bf16 %v680, %v678
        %v709 = vpack.c.bf16 %v683, %v681
        %v710 = vpack.c.bf16 %v684, %v682
        %v711 = vpack.c.bf16 %v687, %v685
        %v712 = vpack.c.bf16 %v688, %v686
        %v713 = vpack.c.bf16 %v691, %v689
        %v714 = vpack.c.bf16 %v692, %v690
        %v715 = vpack.c.bf16 %v695, %v693
        %v716 = vpack.c.bf16 %v696, %v694
        %v717 = vpack.c.bf16 %v699, %v697
        %v718 = vpack.c.bf16 %v700, %v698
        %v719 = vld [vmem:[%s4] sm:$0xff]
        %v720 = vld [vmem:[%s4 + $0x8] sm:$0xff]
        %722 = vset.pattern.permute.xlu0 0
        %723 = vperm.xlu0 %722, %v719
        %v724 = vpop.permute.xlu0 %723
        %727 = vset.pattern.permute.xlu0 0
        %728 = vperm.xlu0 %727, %v720
        %v729 = vpop.permute.xlu0 %728
        %v733 = vunpack.c.l.b16 %v701
        %v734 = vunpack.c.l.b16 %v702
        %v735 = vpack.c.b16 %v734, %v733
        %737 = vmatprep.subr.bf16.mxu0 %v704
        %738 = vmatpush1.bf16.msra.mxu0 %v703
        %739 = vmatprep.subr.bf16.mxu0 %v706
        %740 = vmatpush1.bf16.msra.mxu0 %v705
        %741 = vmatprep.subr.bf16.mxu0 %v708
        %742 = vmatpush1.bf16.msra.mxu0 %v707
        %743 = vmatprep.subr.bf16.mxu0 %v710
        %744 = vmatpush1.bf16.msra.mxu0 %v709
        %745 = vmatprep.subr.bf16.mxu0 %v712
        %746 = vmatpush1.bf16.msra.mxu0 %v711
        %747 = vmatprep.subr.bf16.mxu0 %v714
        %748 = vmatpush1.bf16.msra.mxu0 %v713
        %749 = vmatprep.subr.bf16.mxu0 %v716
        %750 = vmatpush1.bf16.msra.mxu0 %v715
        %751 = vmatprep.subr.bf16.mxu0 %v718
        %752 = vmatpush1.bf16.msra.mxu0 %v717
        %753 = vmatprep.subr.bf16.mxu0 0
        %754 = vmatpush1.bf16.msra.mxu0 0
        %755 = vmatprep.subr.bf16.mxu0 0
        %756 = vmatpush1.bf16.msra.mxu0 0
        %757 = vmatprep.subr.bf16.mxu0 0
        %758 = vmatpush1.bf16.msra.mxu0 0
        %759 = vmatprep.subr.bf16.mxu0 0
        %760 = vmatpush1.bf16.msra.mxu0 0
        %761 = vmatprep.subr.bf16.mxu0 0
        %762 = vmatpush1.bf16.msra.mxu0 0
        %763 = vmatprep.subr.bf16.mxu0 0
        %764 = vmatpush1.bf16.msra.mxu0 0
        %765 = vmatprep.subr.bf16.mxu0 0
        %766 = vmatpush1.bf16.msra.mxu0 0
        %767 = vmatprep.subr.bf16.mxu0 0
        %768 = vmatpush1.bf16.msra.mxu0 0
        %769 = vmatprep.mubr.bf16.mxu0 0
        %770 = vmatmul.mubr.bf16.gmra.mrb[0].mxu0 %v735
        %v771 = vpop.f32.mrb[0].mxu0
        %v772 = vadd.f32 %v724, %v771
        %v773 = vpop.f32.mrb[0].mxu0
        %v774 = vadd.f32 %v724, %v773
        %v775 = vpop.f32.mrb[0].mxu0
        %v776 = vadd.f32 %v729, %v775
        %v777 = vpop.f32.mrb[0].mxu0
        %v778 = vadd.f32 %v729, %v777
        %779 = vdwg.mxu0
        %v780 = vmax.f32 %v772, 0.0
        %v781 = vmax.f32 %v774, 0.0
        %v782 = vmax.f32 %v776, 0.0
        %v783 = vmax.f32 %v778, 0.0
        %v784 = vld [vmem:[%s5] sm:$0xff]
        %v785 = vld [vmem:[%s5 + $0x8] sm:$0xff]
        %787 = vset.pattern.permute.xlu0 0
        %788 = vperm.xlu0 %787, %v784
        %v789 = vpop.permute.xlu0 %788
        %792 = vset.pattern.permute.xlu0 0
        %793 = vperm.xlu0 %792, %v785
        %v794 = vpop.permute.xlu0 %793
        %v796 = vmul.f32 %v780, %v789
        %v797 = vmul.f32 %v781, %v789
        %v798 = vmul.f32 %v782, %v794
        %v799 = vmul.f32 %v783, %v794
        %v800 = vadd.f32 %v796, %v798
        %v801 = vrot.slane %v800, 4
        %v802 = vadd.f32 %v800, %v801
        %v803 = vrot.slane %v802, 2
        %v804 = vadd.f32 %v802, %v803
        %v805 = vrot.slane %v804, 1
        %v806 = vadd.f32 %v804, %v805
        %v807 = vadd.f32 %v797, %v799
        %v808 = vrot.slane %v807, 4
        %v809 = vadd.f32 %v807, %v808
        %v810 = vrot.slane %v809, 2
        %v811 = vadd.f32 %v809, %v810
        %v812 = vrot.slane %v811, 1
        %v813 = vadd.f32 %v811, %v812
        %v814 = vld [vmem:[#allocation2] sm:$0x1]
        %816 = vset.pattern.permute.xlu0 0
        %817 = vperm.xlu0 %816, %v814
        %v818 = vpop.permute.xlu0 %817
        %v820 = vlaneseq
        %v821 = vshrl.u32 %v820, 7
        %v822 = vsub.s32 0, %v821
        %v823 = vrot.slane %v818, %v822
        %v824 = vadd.f32 %v806, %v823
        %v825 = vadd.f32 %v813, %v823
        %v828 = vcombine.low %v824, %v825
        %v830 = vunpack.c.l.s4 1966171168
        %v831 = vunpack.c.0.s8 %v830
        %v832 = vlaneseq
        %v833 = vshrl.u32 %v832, 7
        %v834 = vsub.s32 %v831, %v833
        %v835 = vrot.slane %v828, %v834
        %v837 = vunpack.c.l.s4 1966171168
        %v838 = vunpack.c.0.s8 %v837
        %v839 = vlaneseq
        %v840 = vshrl.u32 %v839, 7
        %v841 = vsub.s32 %v838, %v840
        %v842 = vrot.slane %v835, %v841
        %v844 = vlaneseq
        %vm845 = vcmp.ge.s32.totalorder %v844, 0
        %vm846 = vcmp.lt.s32.totalorder %v844, 256
        %vm847 = vmand %vm845, %vm846
        %848 = vst.msk [vmem:[%s274] sm:$0x3] %vm847, %v842
        %s849 = sand.u32 %s183, 1
        %s850 = scalar_lea.sflag [#allocation4], %s849
        %s851 = sand.u32 %s183, 1
        %s852 = smul.addr %s851, 2
        %s853 = scalar_lea.vmem [#allocation3], %s852
        // Predicated region
        $region49: #{mlp_classifier_forward.1} parent=47 // pred_check
          %p854 = pneg %p193
        $region50: #{mlp_classifier_forward.1} parent=47 // pred_check_branch
          %856 = sbr.rel (%p854) target = $region52
        $region51: #{mlp_classifier_forward.1} parent=47 // pred_region
          %s857 = smul.u32 2, %s23
          %s859 = ssub.s32 32, 32
          %860 = vsyncadd %s850, %s859
          %s861 = smul.addr %s857, 16
          %s862 = scalar_lea.hbm %s7, %s861
          %s864 = sshll.u32 %s853, 4
          %s865 = int_to_ptr.vmem [resolvable:$true] %s864
          %867 = dma.vmem_to_hbm [thread:$0]  %s865, 32, %s862, %s850
        $region52: #{mlp_classifier_forward.1} parent=47 // pred_fallthru
          _
      $region48: #{mlp_classifier_forward.1} parent=5 // pred_fallthru
        _
      %p868 = scmp.le.s32.totalorder 2, %s18
      // Predicated region
      $region53: #{mlp_classifier_forward.1} parent=5 // pred_check
        %p869 = pneg %p868
      $region54: #{mlp_classifier_forward.1} parent=5 // pred_check_branch
        %871 = sbr.rel (%p869) target = $region56
      $region55: #{mlp_classifier_forward.1} parent=5 // pred_region
        %s872 = ssub.s32 %s18, 2
        // Predicated region
        $region57: #{mlp_classifier_forward.1} parent=55 // pred_check
          %p873 = pneg %p199
        $region58: #{mlp_classifier_forward.1} parent=55 // pred_check_branch
          %875 = sbr.rel (%p873) target = $region60
        $region59: #{mlp_classifier_forward.1} parent=55 // pred_region
          %s876 = sand.u32 %s184, 1
          %s877 = scalar_lea.sflag [#allocation4], %s876
          %s878 = sand.u32 %s184, 1
          %s879 = smul.addr %s878, 2
          %s880 = scalar_lea.vmem [#allocation3], %s879
          %881 = dma.done %s877, 32
        $region60: #{mlp_classifier_forward.1} parent=55 // pred_fallthru
          _
      $region56: #{mlp_classifier_forward.1} parent=5 // pred_fallthru
        _
    $region6: #{mlp_classifier_forward.1} parent=1 // loop_footer
      %s22 = sadd.s32 1, %s18
    $region7: #{mlp_classifier_forward.1} parent=1 // loop_footer_branch
      %17 = sbr.rel target = $region3
    $region8: #{mlp_classifier_forward.1} parent=1 // loop_exit
      _
    %882 = vsyncpa [#allocation4], 1
    %s883 = scalar_lea.sflag [#allocation4], 1
    %884 = vsyncpa %s883, 1

</llo_original>
